<compile_context>
chip_gen: v7x
topology: tpu7x:2x2x1
jax: 0.10.0
libtpu: 0.0.40
codegen_flags: <defaults>
</compile_context>

<pallas_src>
import functools

import jax
import jax.numpy as jnp
from jax import lax
from jax.experimental import pallas as pl
from jax.experimental.pallas import tpu as pltpu

VMEM_LIMIT_BYTES = 32 * 1024 * 1024  # safe on v7x (64 MiB phys), > v5e default


def _round_up(x, m):
    return ((x + m - 1) // m) * m


# --------------------------------------------------------------------------
# Kernel 1: tiled input projection for all timesteps (P1 + P3).
#   x   : (M_pad, K_pad)   rows = flattened (T_pad * B_pad)
#   w   : (K_pad, 4H)      (= W_ih^T, K zero-padded)
#   b   : (1, 4H)          (= bias_ih + bias_hh)
#   out : (M_pad, 4H)
# --------------------------------------------------------------------------
def input_proj_kernel(x_ref, w_ref, b_ref, o_ref, acc_ref):
    k = pl.program_id(2)

    @pl.when(k == 0)
    def _():
        acc_ref[...] = jnp.zeros_like(acc_ref)

    acc_ref[...] += jnp.dot(x_ref[...], w_ref[...],
                            preferred_element_type=jnp.float32)

    @pl.when(k == pl.num_programs(2) - 1)
    def _():
        o_ref[...] = (acc_ref[...] + b_ref[...]).astype(o_ref.dtype)


# --------------------------------------------------------------------------
# Kernel 2: sequential LSTM recurrence over time chunks.
#   gx   : block (T_chunk, B_chunk, 4H)  precomputed  x_t @ W_ih^T + b
#   h0,c0: block (B_chunk, H)
#   w_hh : (H, 4H)                       (= W_hh^T)
#   hc   : block (B_chunk, 2H)           packed [h_T | c_T], written last chunk
#   h_sc / c_sc : VMEM scratch carrying the recurrent state across chunks
# --------------------------------------------------------------------------
def lstm_recurrence_kernel(gx_ref, h0_ref, c0_ref, w_hh_ref, hc_ref,
                           h_sc, c_sc, *, t_valid, t_chunk, unroll):
    t_idx = pl.program_id(1)
    H = h0_ref.shape[-1]

    @pl.when(t_idx == 0)
    def _():
        h_sc[...] = h0_ref[...]
        c_sc[...] = c0_ref[...]

    w_hh = w_hh_ref[...]          # loop-invariant load, hoisted
    t_base = t_idx * t_chunk

    def step(t, carry):
        h, c = carry
        # Only the small recurrent matmul sits on the serial t->t+1 chain.
        gates = gx_ref[t] + jnp.dot(h, w_hh, preferred_element_type=jnp.float32)
        # Full-(B,4H)-vreg activations (EUP slot is otherwise idle); gate
        # extraction is then plain slicing of already-activated tensors
        # instead of lane-masked sub-slices feeding the transcendentals.
        sig = jax.nn.sigmoid(gates)
        th = jnp.tanh(gates)
        i = sig[:, 0 * H:1 * H]
        f = sig[:, 1 * H:2 * H]
        g = th[:, 2 * H:3 * H]
        o = sig[:, 3 * H:4 * H]
        c_new = f * c + i * g
        h_new = o * jnp.tanh(c_new)
        # Time-padding guard: steps beyond the real sequence length are no-ops.
        valid = (t_base + t) < t_valid
        return (jnp.where(valid, h_new, h), jnp.where(valid, c_new, c))

    h_fin, c_fin = lax.fori_loop(0, t_chunk, step,
                                 (h_sc[...], c_sc[...]), unroll=unroll)
    h_sc[...] = h_fin
    c_sc[...] = c_fin

    @pl.when(t_idx == pl.num_programs(1) - 1)
    def _():
        # Single lane-dense store of the packed final state.
        hc_ref[...] = jnp.concatenate([h_fin, c_fin], axis=-1)


# --------------------------------------------------------------------------
# Wrapper mirroring RecurrentEncoder.forward (n_layers == 1).
# --------------------------------------------------------------------------
def recurrent_encoder_forward(seq, weight_ih, weight_hh, bias_ih, bias_hh,
                              hx=None, *, time_chunk=32, gx_dtype=jnp.float32):
    """seq: [T, B, F] float32; hx: optional (h, c) each [1, B, H].

    Returns (y_last [B, H], (h_T [1, B, H], c_T [1, B, H])).
    """
    T, B, F = seq.shape
    four_h = weight_ih.shape[0]
    H = weight_hh.shape[1]

    # Matches the module: a missing or batch-mismatched hx is replaced by zeros.
    if hx is None or hx[0].shape[1] != B:
        h0 = jnp.zeros((1, B, H), jnp.float32)
        c0 = jnp.zeros_like(h0)
    else:
        h0, c0 = hx

    # ----- padding / tiling choices -----
    B_pad = _round_up(B, 8)                       # full sublane groups
    T_chunk = min(time_chunk, T)
    T_pad = _round_up(T, T_chunk)
    nt = T_pad // T_chunk
    nb = 2 if (B_pad % 16 == 0) else 1            # v7x: batch across the 2 TCs
    B_chunk = B_pad // nb

    seq_p = jnp.pad(jnp.asarray(seq, jnp.float32),
                    ((0, T_pad - T), (0, B_pad - B), (0, 0)))
    h0_p = jnp.pad(jnp.asarray(h0[0], jnp.float32), ((0, B_pad - B), (0, 0)))
    c0_p = jnp.pad(jnp.asarray(c0[0], jnp.float32), ((0, B_pad - B), (0, 0)))

    w_ih_t = jnp.asarray(weight_ih, jnp.float32).T           # (F, 4H)
    w_hh_t = jnp.asarray(weight_hh, jnp.float32).T           # (H, 4H)
    b = (jnp.asarray(bias_ih, jnp.float32)
         + jnp.asarray(bias_hh, jnp.float32))[None, :]        # (1, 4H)

    # ----- Phase 1: tiled input projection -----
    M = T_pad * B_pad                             # multiple of 8 (B_pad is)
    tm = 256 if M >= 256 else M
    M_pad = _round_up(M, tm)

    tk = min(F, 512) if F % 128 == 0 else F       # full-K block when K is small
    K_pad = _round_up(F, tk)

    if four_h % 128 == 0:
        tn = next(c for c in (512, 256, 128) if four_h % c == 0)
    else:
        tn = four_h                               # full-N block (still lane-dense)

    x_flat = jnp.pad(seq_p.reshape(M, F), ((0, M_pad - M), (0, K_pad - F)))
    w_p = jnp.pad(w_ih_t, ((0, K_pad - F), (0, 0)))

    gx_flat = pl.pallas_call(
        input_proj_kernel,
        out_shape=jax.ShapeDtypeStruct((M_pad, four_h), gx_dtype),
        grid_spec=pltpu.PrefetchScalarGridSpec(
            num_scalar_prefetch=0,
            grid=(M_pad // tm, four_h // tn, K_pad // tk),
            in_specs=[
                pl.BlockSpec((tm, tk), lambda i, j, k: (i, k)),
                pl.BlockSpec((tk, tn), lambda i, j, k: (k, j)),
                pl.BlockSpec((1, tn), lambda i, j, k: (0, j)),
            ],
            out_specs=pl.BlockSpec((tm, tn), lambda i, j, k: (i, j)),
            scratch_shapes=[pltpu.VMEM((tm, tn), jnp.float32)],
        ),
        compiler_params=pltpu.CompilerParams(
            dimension_semantics=("parallel", "parallel", "arbitrary"),
            vmem_limit_bytes=VMEM_LIMIT_BYTES,
        ),
    )(x_flat, w_p, b)

    gx = gx_flat[:M].reshape(T_pad, B_pad, four_h)

    # ----- Phase 2: time-chunked sequential recurrence -----
    kern = functools.partial(
        lstm_recurrence_kernel,
        t_valid=T, t_chunk=T_chunk, unroll=min(8, T_chunk),
    )
    hc = pl.pallas_call(
        kern,
        out_shape=jax.ShapeDtypeStruct((B_pad, 2 * H), jnp.float32),
        grid_spec=pltpu.PrefetchScalarGridSpec(
            num_scalar_prefetch=0,
            grid=(nb, nt),                         # (batch-parallel, time-serial)
            in_specs=[
                pl.BlockSpec((T_chunk, B_chunk, four_h), lambda bb, t: (t, bb, 0)),
                pl.BlockSpec((B_chunk, H), lambda bb, t: (bb, 0)),
                pl.BlockSpec((B_chunk, H), lambda bb, t: (bb, 0)),
                pl.BlockSpec((H, four_h), lambda bb, t: (0, 0)),
            ],
            out_specs=pl.BlockSpec((B_chunk, 2 * H), lambda bb, t: (bb, 0)),
            scratch_shapes=[
                pltpu.VMEM((B_chunk, H), jnp.float32),
                pltpu.VMEM((B_chunk, H), jnp.float32),
            ],
        ),
        compiler_params=pltpu.CompilerParams(
            dimension_semantics=("parallel", "arbitrary"),
            vmem_limit_bytes=VMEM_LIMIT_BYTES,
        ),
    )(gx, h0_p, c0_p, w_hh_t)

    h_T = hc[:B, :H][None]        # [1, B, H]
    c_T = hc[:B, H:][None]        # [1, B, H]
    y_last = h_T[0]               # y[-1] equals the final hidden state
    return y_last, (h_T, c_T)


# --------------------------------------------------------------------------
# Pure-JAX reference matching torch.nn.LSTM semantics (n_layers = 1).
# --------------------------------------------------------------------------
def lstm_reference(seq, weight_ih, weight_hh, bias_ih, bias_hh, h0, c0):
    H = weight_hh.shape[1]
    b = bias_ih + bias_hh

    def step(carry, x_t):
        h, c = carry
        gates = x_t @ weight_ih.T + h @ weight_hh.T + b
        i = jax.nn.sigmoid(gates[:, 0 * H:1 * H])
        f = jax.nn.sigmoid(gates[:, 1 * H:2 * H])
        g = jnp.tanh(gates[:, 2 * H:3 * H])
        o = jax.nn.sigmoid(gates[:, 3 * H:4 * H])
        c_new = f * c + i * g
        h_new = o * jnp.tanh(c_new)
        return (h_new, c_new), h_new

    (h_T, c_T), ys = jax.lax.scan(step, (h0[0], c0[0]), seq)
    return ys[-1], (h_T[None], c_T[None])


if __name__ == "__main__":
    T, B, F, H = 8, 2, 16, 32

    key = jax.random.PRNGKey(0)
    k_seq, k_wih, k_whh, k_bih, k_bhh, k_h, k_c = jax.random.split(key, 7)

    seq = jax.random.normal(k_seq, (T, B, F), dtype=jnp.float32)

    bound = 1.0 / jnp.sqrt(jnp.float32(H))
    weight_ih = jax.random.uniform(k_wih, (4 * H, F), jnp.float32, -bound, bound)
    weight_hh = jax.random.uniform(k_whh, (4 * H, H), jnp.float32, -bound, bound)
    bias_ih = jax.random.uniform(k_bih, (4 * H,), jnp.float32, -bound, bound)
    bias_hh = jax.random.uniform(k_bhh, (4 * H,), jnp.float32, -bound, bound)

    # --- hx=None path (init_hidden) ---
    y_last, (h_T, c_T) = recurrent_encoder_forward(
        seq, weight_ih, weight_hh, bias_ih, bias_hh, hx=None)
    jax.block_until_ready((y_last, h_T, c_T))

    h0 = jnp.zeros((1, B, H), jnp.float32)
    c0 = jnp.zeros_like(h0)
    y_ref, (h_ref, c_ref) = lstm_reference(
        seq, weight_ih, weight_hh, bias_ih, bias_hh, h0, c0)

    assert jnp.allclose(y_last, y_ref, atol=1e-5, rtol=1e-5)
    assert jnp.allclose(h_T, h_ref, atol=1e-5, rtol=1e-5)
    assert jnp.allclose(c_T, c_ref, atol=1e-5, rtol=1e-5)

    # --- caller-provided hx path ---
    h_in = 0.1 * jax.random.normal(k_h, (1, B, H), dtype=jnp.float32)
    c_in = 0.1 * jax.random.normal(k_c, (1, B, H), dtype=jnp.float32)
    y2, (h2, c2) = recurrent_encoder_forward(
        seq, weight_ih, weight_hh, bias_ih, bias_hh, hx=(h_in, c_in))
    jax.block_until_ready((y2, h2, c2))
    y2_ref, (h2_ref, c2_ref) = lstm_reference(
        seq, weight_ih, weight_hh, bias_ih, bias_hh, h_in, c_in)

    assert jnp.allclose(y2, y2_ref, atol=1e-5, rtol=1e-5)
    assert jnp.allclose(h2, h2_ref, atol=1e-5, rtol=1e-5)
    assert jnp.allclose(c2, c2_ref, atol=1e-5, rtol=1e-5)

    print("KERNEL_OK")
</pallas_src>

<mosaic_0001>
module attributes {stable_mosaic.version = 11 : i64} {
  func.func @input_proj_kernel(%arg0: i32, %arg1: i32, %arg2: i32, %arg3: memref<64x16xf32, #tpu.memory_space<vmem>>, %arg4: memref<16x128xf32, #tpu.memory_space<vmem>>, %arg5: memref<1x128xf32, #tpu.memory_space<vmem>>, %arg6: memref<64x128xf32, #tpu.memory_space<vmem>>, %arg7: memref<64x128xf32, #tpu.memory_space<vmem>>) attributes {dimension_semantics = [#tpu.dimension_semantics<parallel>, #tpu.dimension_semantics<parallel>, #tpu.dimension_semantics<arbitrary>], iteration_bounds = array<i64: 1, 1, 1>, scalar_prefetch = 0 : i64, scratch_operands = 1 : i64, tpu.core_type = #tpu.core_type<tc>, window_params = [{transform_indices = @transform_0, window_bounds = array<i64: 64, 16>}, {transform_indices = @transform_1, window_bounds = array<i64: 16, 128>}, {transform_indices = @transform_2, window_bounds = array<i64: 1, 128>}, {transform_indices = @transform_3, window_bounds = array<i64: 64, 128>}]} {
    %c0_i32 = arith.constant 0 : i32
    %0 = arith.cmpi eq, %arg2, %c0_i32 : i32
    %1 = arith.extui %0 : i1 to i32
    %c0_i32_0 = arith.constant 0 : i32
    %2 = arith.cmpi ne, %1, %c0_i32_0 : i32
    scf.if %2 {
      %cst_10 = arith.constant 0.000000e+00 : f32
      %12 = vector.broadcast %cst_10 : f32 to vector<64x128xf32>
      %c0_11 = arith.constant 0 : index
      %c0_12 = arith.constant 0 : index
      %13 = vector.load %arg7[%c0_11, %c0_12] : memref<64x128xf32, #tpu.memory_space<vmem>>, vector<64x128xf32>
      tpu.vector_store %arg7[%c0_11, %c0_12], %12 {strides = array<i32>} : memref<64x128xf32, #tpu.memory_space<vmem>>, vector<64x128xf32>,
    } else {
    }
    %c0 = arith.constant 0 : index
    %c0_1 = arith.constant 0 : index
    %3 = vector.load %arg7[%c0, %c0_1] : memref<64x128xf32, #tpu.memory_space<vmem>>, vector<64x128xf32>
    %c0_2 = arith.constant 0 : index
    %c0_3 = arith.constant 0 : index
    %4 = vector.load %arg3[%c0_2, %c0_3] : memref<64x16xf32, #tpu.memory_space<vmem>>, vector<64x16xf32>
    %c0_4 = arith.constant 0 : index
    %c0_5 = arith.constant 0 : index
    %5 = vector.load %arg4[%c0_4, %c0_5] : memref<16x128xf32, #tpu.memory_space<vmem>>, vector<16x128xf32>
    %cst = arith.constant dense<0.000000e+00> : vector<64x128xf32>
    %6 = tpu.matmul %4, %5, %cst {dimension_numbers = #tpu.dot_dimension_numbers<[1], [0], [0], [1], [0, 0, 1, 1], [], []>} : vector<64x16xf32>, vector<16x128xf32>, vector<64x128xf32> -> vector<64x128xf32>
    %7 = arith.addf %3, %6 : vector<64x128xf32>
    %c0_6 = arith.constant 0 : index
    %c0_7 = arith.constant 0 : index
    %8 = vector.load %arg7[%c0_6, %c0_7] : memref<64x128xf32, #tpu.memory_space<vmem>>, vector<64x128xf32>
    tpu.vector_store %arg7[%c0_6, %c0_7], %7 {strides = array<i32>} : memref<64x128xf32, #tpu.memory_space<vmem>>, vector<64x128xf32>,
    %c0_i32_8 = arith.constant 0 : i32
    %9 = arith.cmpi eq, %arg2, %c0_i32_8 : i32
    %10 = arith.extui %9 : i1 to i32
    %c0_i32_9 = arith.constant 0 : i32
    %11 = arith.cmpi ne, %10, %c0_i32_9 : i32
    scf.if %11 {
      %c0_10 = arith.constant 0 : index
      %c0_11 = arith.constant 0 : index
      %12 = vector.load %arg7[%c0_10, %c0_11] : memref<64x128xf32, #tpu.memory_space<vmem>>, vector<64x128xf32>
      %c0_12 = arith.constant 0 : index
      %c0_13 = arith.constant 0 : index
      %13 = vector.load %arg5[%c0_12, %c0_13] : memref<1x128xf32, #tpu.memory_space<vmem>>, vector<1x128xf32>
      %14 = vector.broadcast %13 : vector<1x128xf32> to vector<64x128xf32>
      %15 = arith.addf %12, %14 : vector<64x128xf32>
      %c0_14 = arith.constant 0 : index
      %c0_15 = arith.constant 0 : index
      %16 = vector.load %arg6[%c0_14, %c0_15] : memref<64x128xf32, #tpu.memory_space<vmem>>, vector<64x128xf32>
      tpu.vector_store %arg6[%c0_14, %c0_15], %15 {strides = array<i32>} : memref<64x128xf32, #tpu.memory_space<vmem>>, vector<64x128xf32>,
    } else {
    }
    return
  }
  func.func @transform_0(%arg0: i32, %arg1: i32, %arg2: i32) -> (i32, i32) {
    %c0_i32 = arith.constant 0 : i32
    return %arg0, %arg2 : i32, i32
  }
  func.func @transform_1(%arg0: i32, %arg1: i32, %arg2: i32) -> (i32, i32) {
    %c0_i32 = arith.constant 0 : i32
    return %arg2, %arg1 : i32, i32
  }
  func.func @transform_2(%arg0: i32, %arg1: i32, %arg2: i32) -> (i32, i32) {
    %c0_i32 = arith.constant 0 : i32
    %c0_i32_0 = arith.constant 0 : i32
    return %c0_i32, %arg1 : i32, i32
  }
  func.func @transform_3(%arg0: i32, %arg1: i32, %arg2: i32) -> (i32, i32) {
    %c0_i32 = arith.constant 0 : i32
    return %arg0, %arg1 : i32, i32
  }
}

</mosaic_0001>

<llo_original>
// kernel: tpu_custom_call.1
$region0: #{tpu_custom_call.1}
  #allocation0 [shape = 'u32[]', space=smem, size = 0x4, offset = 0x4, fixed_abs, tag = 'smem constant byte address 0x4 - core index']
  #allocation1 [shape = 'u32[144,128]{1,0:T(1,128)}', space=vmem, size = 0x12000, scoped, tag = 'internal scratch']
  #allocation2 [shape = 'f32[64,128]{1,0:T(8,128)}', space=vmem, size = 0x8000, scoped, tag = 'scratch operand']
  %s0 = inlined_call_operand.vmem [shape: f32[64,16], index: 0, kind: input, shape index: {}]
  %s1 = inlined_call_operand.vmem [shape: f32[16,128], index: 1, kind: input, shape index: {}]
  %s2 = inlined_call_operand.vmem [shape: f32[1,128], index: 2, kind: input, shape index: {}]
  %s3 = inlined_call_operand.hbm [shape: f32[64,128], index: 3, kind: output, shape index: {}]
  %s4 = sld [smem:[#allocation0]]
  $region30: #{tpu_custom_call.1} parent=0
    _
  %s6 = ssub.s32 1, %s4
  %s7 = scalar_select 0, %s6, %s4
  $region1: #{tpu_custom_call.1} parent=0
    #allocation3 [shape = 'u8[32768]{0}', space=vmem, size = 0x8000, scoped, tag = 'output window, operand 0, single buffered']
    #allocation4 [shape = 's32[1]{0}', space=sflag, size = 0x4, scoped, tag = 'scoped memory for tpu_custom_call.1']
    %8 = vsyncpa [#allocation4], 0
    // Predicated region
    $region2: #{tpu_custom_call.1} parent=1 // pred_check
      _
    $region3: #{tpu_custom_call.1} parent=1 // pred_check_branch
      %10 = sbr.rel (0) target = $region5
    $region4: #{tpu_custom_call.1} parent=1 // pred_region
      _
    $region5: #{tpu_custom_call.1} parent=1 // pred_fallthru
      _
    // Predicated region
    $region6: #{tpu_custom_call.1} parent=1 // pred_check
      _
    $region7: #{tpu_custom_call.1} parent=1 // pred_check_branch
      %12 = sbr.rel (0) target = $region9
    $region8: #{tpu_custom_call.1} parent=1 // pred_region
      _
    $region9: #{tpu_custom_call.1} parent=1 // pred_fallthru
      _
    // Predicated region
    $region10: #{tpu_custom_call.1} parent=1 // pred_check
      _
    $region11: #{tpu_custom_call.1} parent=1 // pred_check_branch
      %14 = sbr.rel (0) target = $region13
    $region12: #{tpu_custom_call.1} parent=1 // pred_region
      _
    $region13: #{tpu_custom_call.1} parent=1 // pred_fallthru
      _
    %p15 = scmp.eq.s32.totalorder 0, 0
    // Predicated region
    $region14: #{tpu_custom_call.1} parent=1 // pred_check
      %p16 = pneg %p15
    $region15: #{tpu_custom_call.1} parent=1 // pred_check_branch
      %18 = sbr.rel (%p16) target = $region17
    $region16: #{tpu_custom_call.1} parent=1 // pred_region
      %19 = vst [vmem:[#allocation2] sm:$0xff] 0.0
      %20 = vst [vmem:[#allocation2 + $0x8] sm:$0xff] 0.0
      %21 = vst [vmem:[#allocation2 + $0x10] sm:$0xff] 0.0
      %22 = vst [vmem:[#allocation2 + $0x18] sm:$0xff] 0.0
      %23 = vst [vmem:[#allocation2 + $0x20] sm:$0xff] 0.0
      %24 = vst [vmem:[#allocation2 + $0x28] sm:$0xff] 0.0
      %25 = vst [vmem:[#allocation2 + $0x30] sm:$0xff] 0.0
      %26 = vst [vmem:[#allocation2 + $0x38] sm:$0xff] 0.0
    $region17: #{tpu_custom_call.1} parent=1 // pred_fallthru
      _
    %v27 = vld [vmem:[#allocation2] sm:$0xff]
    %v28 = vld [vmem:[#allocation2 + $0x8] sm:$0xff]
    %v29 = vld [vmem:[#allocation2 + $0x10] sm:$0xff]
    %v30 = vld [vmem:[#allocation2 + $0x18] sm:$0xff]
    %v31 = vld [vmem:[#allocation2 + $0x20] sm:$0xff]
    %v32 = vld [vmem:[#allocation2 + $0x28] sm:$0xff]
    %v33 = vld [vmem:[#allocation2 + $0x30] sm:$0xff]
    %v34 = vld [vmem:[#allocation2 + $0x38] sm:$0xff]
    %v35 = vld [vmem:[%s0] sm:$0xff]
    %v36 = vld [vmem:[%s0 + $0x8] sm:$0xff]
    %v37 = vld [vmem:[%s0 + $0x10] sm:$0xff]
    %v38 = vld [vmem:[%s0 + $0x18] sm:$0xff]
    %v39 = vld [vmem:[%s0 + $0x20] sm:$0xff]
    %v40 = vld [vmem:[%s0 + $0x28] sm:$0xff]
    %v41 = vld [vmem:[%s0 + $0x30] sm:$0xff]
    %v42 = vld [vmem:[%s0 + $0x38] sm:$0xff]
    %v43 = vld [vmem:[%s1] sm:$0xff]
    %v44 = vld [vmem:[%s1 + $0x8] sm:$0xff]
    %vm45 = vcmask 130048
    %v47 = vsel %vm45, %v35, 0
    %v50 = vsel %vm45, %v36, 0
    %v53 = vsel %vm45, %v37, 0
    %v56 = vsel %vm45, %v38, 0
    %v59 = vsel %vm45, %v39, 0
    %v62 = vsel %vm45, %v40, 0
    %v65 = vsel %vm45, %v41, 0
    %v68 = vsel %vm45, %v42, 0
    %70 = vmatprep.subr.mxu0 0.0
    %71 = vmatpush1.msra.mxu0 %v43
    %72 = vmatprep.subr.mxu0 0.0
    %73 = vmatpush1.msra.mxu0 %v44
    %74 = vmatprep.subr.mxu0 0.0
    %75 = vmatpush1.msra.mxu0 0.0
    %76 = vmatprep.subr.mxu0 0.0
    %77 = vmatpush1.msra.mxu0 0.0
    %78 = vmatprep.subr.mxu0 0.0
    %79 = vmatpush1.msra.mxu0 0.0
    %80 = vmatprep.subr.mxu0 0.0
    %81 = vmatpush1.msra.mxu0 0.0
    %82 = vmatprep.subr.mxu0 0.0
    %83 = vmatpush1.msra.mxu0 0.0
    %84 = vmatprep.subr.mxu0 0.0
    %85 = vmatpush1.msra.mxu0 0.0
    %86 = vmatprep.subr.mxu0 0.0
    %87 = vmatpush1.msra.mxu0 0.0
    %88 = vmatprep.subr.mxu0 0.0
    %89 = vmatpush1.msra.mxu0 0.0
    %90 = vmatprep.subr.mxu0 0.0
    %91 = vmatpush1.msra.mxu0 0.0
    %92 = vmatprep.subr.mxu0 0.0
    %93 = vmatpush1.msra.mxu0 0.0
    %94 = vmatprep.subr.mxu0 0.0
    %95 = vmatpush1.msra.mxu0 0.0
    %96 = vmatprep.subr.mxu0 0.0
    %97 = vmatpush1.msra.mxu0 0.0
    %98 = vmatprep.subr.mxu0 0.0
    %99 = vmatpush1.msra.mxu0 0.0
    %100 = vmatprep.subr.mxu0 0.0
    %101 = vmatpush1.msra.mxu0 0.0
    %102 = vmatprep.subr.mxu0 0.0
    %103 = vmatpush1.msra.mxu0 0.0
    %104 = vmatprep.subr.mxu0 0.0
    %105 = vmatpush1.msra.mxu0 0.0
    %106 = vmatprep.subr.mxu0 0.0
    %107 = vmatpush1.msra.mxu0 0.0
    %108 = vmatprep.subr.mxu0 0.0
    %109 = vmatpush1.msra.mxu0 0.0
    %110 = vmatprep.subr.mxu0 0.0
    %111 = vmatpush1.msra.mxu0 0.0
    %112 = vmatprep.subr.mxu0 0.0
    %113 = vmatpush1.msra.mxu0 0.0
    %114 = vmatprep.subr.mxu0 0.0
    %115 = vmatpush1.msra.mxu0 0.0
    %116 = vmatprep.subr.mxu0 0.0
    %117 = vmatpush1.msra.mxu0 0.0
    %118 = vmatprep.subr.mxu0 0.0
    %119 = vmatpush1.msra.mxu0 0.0
    %120 = vmatprep.subr.mxu0 0.0
    %121 = vmatpush1.msra.mxu0 0.0
    %122 = vmatprep.subr.mxu0 0.0
    %123 = vmatpush1.msra.mxu0 0.0
    %124 = vmatprep.subr.mxu0 0.0
    %125 = vmatpush1.msra.mxu0 0.0
    %126 = vmatprep.subr.mxu0 0.0
    %127 = vmatpush1.msra.mxu0 0.0
    %128 = vmatprep.subr.mxu0 0.0
    %129 = vmatpush1.msra.mxu0 0.0
    %130 = vmatprep.subr.mxu0 0.0
    %131 = vmatpush1.msra.mxu0 0.0
    %132 = vmatprep.subr.mxu0 0.0
    %133 = vmatpush1.msra.mxu0 0.0
    %134 = vmatprep.mubr.f32.mxu0 0.0
    %135 = vmatmul.mubr.f32.gmra.mrb[0].mxu0 %v47
    %v136 = vpop.f32.mrb[0].mxu0
    %v137 = vadd.f32 0.0, %v136
    %v138 = vpop.f32.mrb[0].mxu0
    %139 = vmatprep.mubr.f32.mxu0 0.0
    %140 = vmatmul.mubr.f32.gmra.mrb[0].mxu0 %v50
    %v141 = vpop.f32.mrb[0].mxu0
    %v142 = vadd.f32 0.0, %v141
    %v143 = vpop.f32.mrb[0].mxu0
    %144 = vmatprep.mubr.f32.mxu0 0.0
    %145 = vmatmul.mubr.f32.gmra.mrb[0].mxu0 %v53
    %v146 = vpop.f32.mrb[0].mxu0
    %v147 = vadd.f32 0.0, %v146
    %v148 = vpop.f32.mrb[0].mxu0
    %149 = vmatprep.mubr.f32.mxu0 0.0
    %150 = vmatmul.mubr.f32.gmra.mrb[0].mxu0 %v56
    %v151 = vpop.f32.mrb[0].mxu0
    %v152 = vadd.f32 0.0, %v151
    %v153 = vpop.f32.mrb[0].mxu0
    %154 = vmatprep.mubr.f32.mxu0 0.0
    %155 = vmatmul.mubr.f32.gmra.mrb[0].mxu0 %v59
    %v156 = vpop.f32.mrb[0].mxu0
    %v157 = vadd.f32 0.0, %v156
    %v158 = vpop.f32.mrb[0].mxu0
    %159 = vmatprep.mubr.f32.mxu0 0.0
    %160 = vmatmul.mubr.f32.gmra.mrb[0].mxu0 %v62
    %v161 = vpop.f32.mrb[0].mxu0
    %v162 = vadd.f32 0.0, %v161
    %v163 = vpop.f32.mrb[0].mxu0
    %164 = vmatprep.mubr.f32.mxu0 0.0
    %165 = vmatmul.mubr.f32.gmra.mrb[0].mxu0 %v65
    %v166 = vpop.f32.mrb[0].mxu0
    %v167 = vadd.f32 0.0, %v166
    %v168 = vpop.f32.mrb[0].mxu0
    %169 = vmatprep.mubr.f32.mxu0 0.0
    %170 = vmatmul.mubr.f32.gmra.mrb[0].mxu0 %v68
    %v171 = vpop.f32.mrb[0].mxu0
    %v172 = vadd.f32 0.0, %v171
    %v173 = vpop.f32.mrb[0].mxu0
    %174 = vdwg.mxu0
    %v175 = vadd.f32 %v27, %v137
    %v176 = vadd.f32 %v28, %v142
    %v177 = vadd.f32 %v29, %v147
    %v178 = vadd.f32 %v30, %v152
    %v179 = vadd.f32 %v31, %v157
    %v180 = vadd.f32 %v32, %v162
    %v181 = vadd.f32 %v33, %v167
    %v182 = vadd.f32 %v34, %v172
    %183 = vst [vmem:[#allocation2] sm:$0xff] %v175
    %184 = vst [vmem:[#allocation2 + $0x8] sm:$0xff] %v176
    %185 = vst [vmem:[#allocation2 + $0x10] sm:$0xff] %v177
    %186 = vst [vmem:[#allocation2 + $0x18] sm:$0xff] %v178
    %187 = vst [vmem:[#allocation2 + $0x20] sm:$0xff] %v179
    %188 = vst [vmem:[#allocation2 + $0x28] sm:$0xff] %v180
    %189 = vst [vmem:[#allocation2 + $0x30] sm:$0xff] %v181
    %190 = vst [vmem:[#allocation2 + $0x38] sm:$0xff] %v182
    // Predicated region
    $region18: #{tpu_custom_call.1} parent=1 // pred_check
      %p191 = pneg %p15
    $region19: #{tpu_custom_call.1} parent=1 // pred_check_branch
      %193 = sbr.rel (%p191) target = $region21
    $region20: #{tpu_custom_call.1} parent=1 // pred_region
      %v194 = vld [vmem:[#allocation2] sm:$0xff]
      %v195 = vld [vmem:[#allocation2 + $0x8] sm:$0xff]
      %v196 = vld [vmem:[#allocation2 + $0x10] sm:$0xff]
      %v197 = vld [vmem:[#allocation2 + $0x18] sm:$0xff]
      %v198 = vld [vmem:[#allocation2 + $0x20] sm:$0xff]
      %v199 = vld [vmem:[#allocation2 + $0x28] sm:$0xff]
      %v200 = vld [vmem:[#allocation2 + $0x30] sm:$0xff]
      %v201 = vld [vmem:[#allocation2 + $0x38] sm:$0xff]
      %v202 = vld [vmem:[%s2] sm:$0x1]
      %v204 = vlaneseq
      %v205 = vshrl.u32 %v204, 7
      %v206 = vsub.s32 0, %v205
      %v207 = vrot.slane %v202, %v206
      %v209 = vadd.f32 %v194, %v207
      %v210 = vadd.f32 %v195, %v207
      %v211 = vadd.f32 %v196, %v207
      %v212 = vadd.f32 %v197, %v207
      %v213 = vadd.f32 %v198, %v207
      %v214 = vadd.f32 %v199, %v207
      %v215 = vadd.f32 %v200, %v207
      %v216 = vadd.f32 %v201, %v207
      %217 = vst [vmem:[#allocation3] sm:$0xff] %v209
      %218 = vst [vmem:[#allocation3 + $0x8] sm:$0xff] %v210
      %219 = vst [vmem:[#allocation3 + $0x10] sm:$0xff] %v211
      %220 = vst [vmem:[#allocation3 + $0x18] sm:$0xff] %v212
      %221 = vst [vmem:[#allocation3 + $0x20] sm:$0xff] %v213
      %222 = vst [vmem:[#allocation3 + $0x28] sm:$0xff] %v214
      %223 = vst [vmem:[#allocation3 + $0x30] sm:$0xff] %v215
      %224 = vst [vmem:[#allocation3 + $0x38] sm:$0xff] %v216
    $region21: #{tpu_custom_call.1} parent=1 // pred_fallthru
      _
    // Predicated region
    $region22: #{tpu_custom_call.1} parent=1 // pred_check
      _
    $region23: #{tpu_custom_call.1} parent=1 // pred_check_branch
      %226 = sbr.rel (0) target = $region25
    $region24: #{tpu_custom_call.1} parent=1 // pred_region
      %s228 = ssub.s32 1024, 1024
      %229 = vsyncadd [#allocation4], %s228
      %s230 = sshll.u32 [#allocation3], 4
      %s231 = int_to_ptr.vmem [resolvable:$true] %s230
      %236 = dma.vmem_to_hbm [thread:$0]  %s231, 1024, %s3, [#allocation4], 128, 128, 8
    $region25: #{tpu_custom_call.1} parent=1 // pred_fallthru
      _
    // Predicated region
    $region26: #{tpu_custom_call.1} parent=1 // pred_check
      _
    $region27: #{tpu_custom_call.1} parent=1 // pred_check_branch
      %238 = sbr.rel (0) target = $region29
    $region28: #{tpu_custom_call.1} parent=1 // pred_region
      %239 = dma.done [#allocation4], 1024
    $region29: #{tpu_custom_call.1} parent=1 // pred_fallthru
      _
    %240 = vsyncpa [#allocation4], 1

</llo_original>
